<compile_context>
chip_gen: v7x
topology: tpu7x:2x2x1
jax: 0.10.0
libtpu: 0.0.40
codegen_flags: <defaults>
</compile_context>

<pallas_src>
import functools

import jax
import jax.numpy as jnp
from jax import lax
from jax.experimental import pallas as pl
from jax.experimental.pallas import tpu as pltpu


def _round_up(x, m):
    return ((x + m - 1) // m) * m


def _frequency_loss_kernel(w_ref, p_ref, t_ref, o_ref, acc_ref, *, f_pad, loss_type):
    i = pl.program_id(1)

    @pl.when(i == 0)
    def _():
        acc_ref[...] = jnp.zeros_like(acc_ref)

    # Constant DFT matrix: rows [0, f_pad) = cos, rows [f_pad, 2*f_pad) = -sin
    # (rows >= n_freq inside each half are zero padding).  VMEM-resident.
    w = w_ref[...]

    # Cast to f32 in-kernel (keeps HBM traffic at the storage dtype's width).
    xp = p_ref[...].astype(jnp.float32)          # (L, T)
    xt = t_ref[...].astype(jnp.float32)          # (L, T)

    if loss_type == "complex":
        # rfft is linear: rfft(p) - rfft(t) == rfft(p - t) -> a single MXU
        # matmul per tile instead of two.
        fd = jnp.dot(w, xp - xt, preferred_element_type=jnp.float32)
        dre, dim = fd[:f_pad], fd[f_pad:]        # sublane-aligned static slices
        val = jnp.sqrt(dre * dre + dim * dim)
    else:
        # rfft over L as one MXU matmul per input: (2*f_pad, L) @ (L, T).
        fp = jnp.dot(w, xp, preferred_element_type=jnp.float32)
        ft = jnp.dot(w, xt, preferred_element_type=jnp.float32)
        re_p, im_p = fp[:f_pad], fp[f_pad:]
        re_t, im_t = ft[:f_pad], ft[f_pad:]
        if loss_type == "mag":
            mag_p = jnp.sqrt(re_p * re_p + im_p * im_p)
            mag_t = jnp.sqrt(re_t * re_t + im_t * im_t)
            val = jnp.abs(mag_p - mag_t)
        else:  # "phase"
            # TODO(synk): atan2 lowering is not exercised in __main__; support may vary by Mosaic version.
            val = jnp.abs(jnp.arctan2(im_p, re_p) - jnp.arctan2(im_t, re_t))

    # Padded frequency rows / padded columns contribute exactly 0 to `val`,
    # so the running sum stays correct.
    acc_ref[...] += val

    @pl.when(i == pl.num_programs(1) - 1)
    def _():
        part_sum = jnp.sum(acc_ref[...])
        lane = lax.broadcasted_iota(jnp.int32, o_ref.shape, 1)
        o_ref[...] = jnp.where(lane == 0, part_sum, 0.0)


def frequency_loss(predictions, targets, *, fourier_loss_type="complex",
                   num_parts=2, max_col_tile=4096):
    assert predictions.shape == targets.shape
    assert fourier_loss_type in ("complex", "mag", "phase")
    assert predictions.ndim >= 2

    shape = predictions.shape
    b, seq = int(shape[0]), int(shape[1])
    m = 1
    for s in shape[2:]:
        m *= int(s)
    n_freq = seq // 2 + 1
    f_pad = _round_up(n_freq, 8)
    n_cols = b * m
    total = float(b * n_freq * m)

    # Lane-dense layout: FFT axis -> sublanes / matmul contraction axis,
    # (batch * remaining dims) -> 128-lane axis.
    def to_cols(x):
        x = x.reshape(b, seq, m)
        return jnp.moveaxis(x, 1, 0).reshape(seq, n_cols)

    xp = to_cols(predictions)
    xt = to_cols(targets)

    # Column tile: large enough to amortize the ~0.35us/step overhead, small
    # enough that 2 inputs x 2 pipeline buffers x (seq, tile) f32 stays well
    # inside scoped VMEM on every TPU generation (v5e 16MiB default, v7x 64MiB
    # physical).
    tile_cap = ((2 * 1024 * 1024) // (4 * seq)) // 128 * 128
    tile_cap = max(128, min(max_col_tile, tile_cap))
    tile = min(tile_cap, _round_up(-(-n_cols // num_parts), 128))

    n_pad = _round_up(n_cols, tile * num_parts)
    if n_pad != n_cols:
        pad = ((0, 0), (0, n_pad - n_cols))
        xp = jnp.pad(xp, pad)   # zero columns -> zero spectrum -> zero contribution
        xt = jnp.pad(xt, pad)
    steps = n_pad // (tile * num_parts)

    # Real-DFT matrix, built once at trace time (hoisted out of the grid loop).
    f_idx = jnp.arange(n_freq, dtype=jnp.float32)
    l_idx = jnp.arange(seq, dtype=jnp.float32)
    ang = (2.0 * jnp.pi / seq) * jnp.mod(jnp.outer(f_idx, l_idx), float(seq))
    w = jnp.zeros((2 * f_pad, seq), jnp.float32)
    w = w.at[:n_freq].set(jnp.cos(ang))
    w = w.at[f_pad:f_pad + n_freq].set(-jnp.sin(ang))

    kernel = functools.partial(_frequency_loss_kernel, f_pad=f_pad,
                               loss_type=fourier_loss_type)

    def col_map(c, i):
        return (0, c * steps + i)

    partials = pl.pallas_call(
        kernel,
        out_shape=jax.ShapeDtypeStruct((1, 128 * num_parts), jnp.float32),
        grid_spec=pltpu.PrefetchScalarGridSpec(
            num_scalar_prefetch=0,
            grid=(num_parts, steps),
            in_specs=[
                pl.BlockSpec((2 * f_pad, seq), lambda c, i: (0, 0)),  # DFT matrix, resident
                pl.BlockSpec((seq, tile), col_map),
                pl.BlockSpec((seq, tile), col_map),
            ],
            out_specs=pl.BlockSpec((1, 128), lambda c, i: (0, c)),
            scratch_shapes=[pltpu.VMEM((f_pad, tile), jnp.float32)],
        ),
        compiler_params=pltpu.CompilerParams(
            dimension_semantics=("parallel", "arbitrary"),
            vmem_limit_bytes=32 * 1024 * 1024),
    )(w, xp, xt)

    # Per-part partial sums (lane 0 of each 128-lane slab); everything else is 0.
    return jnp.sum(partials) * (1.0 / total)


def _reference_loss(predictions, targets, fourier_loss_type):
    pf = jnp.fft.rfft(predictions.astype(jnp.float32), axis=1)
    tf = jnp.fft.rfft(targets.astype(jnp.float32), axis=1)
    if fourier_loss_type == "complex":
        return jnp.mean(jnp.abs(pf - tf))
    if fourier_loss_type == "mag":
        return jnp.mean(jnp.abs(jnp.abs(pf) - jnp.abs(tf)))
    return jnp.mean(jnp.abs(jnp.angle(pf) - jnp.angle(tf)))


if __name__ == "__main__":
    key = jax.random.PRNGKey(0)
    k1, k2 = jax.random.split(key)
    # (batch=2, seq=16, channels=4, hidden=32); rfft is taken over dim=1 (seq).
    shape = (2, 16, 4, 32)
    predictions = jax.random.normal(k1, shape, dtype=jnp.float32)
    targets = jax.random.normal(k2, shape, dtype=jnp.float32)

    for loss_type in ("complex", "mag"):
        out = jax.block_until_ready(
            frequency_loss(predictions, targets, fourier_loss_type=loss_type))
        ref = jax.block_until_ready(
            _reference_loss(predictions, targets, loss_type))
        assert jnp.allclose(out, ref, rtol=2e-3, atol=1e-5), (loss_type, out, ref)
    print("KERNEL_OK")
</pallas_src>

<mosaic_0001>
module attributes {stable_mosaic.version = 11 : i64} {
  func.func @_frequency_loss_kernel(%arg0: i32, %arg1: i32, %arg2: memref<32x16xf32, #tpu.memory_space<vmem>>, %arg3: memref<16x128xf32, #tpu.memory_space<vmem>>, %arg4: memref<16x128xf32, #tpu.memory_space<vmem>>, %arg5: memref<1x128xf32, #tpu.memory_space<vmem>>, %arg6: memref<16x128xf32, #tpu.memory_space<vmem>>) attributes {dimension_semantics = [#tpu.dimension_semantics<parallel>, #tpu.dimension_semantics<arbitrary>], iteration_bounds = array<i64: 2, 1>, scalar_prefetch = 0 : i64, scratch_operands = 1 : i64, tpu.core_type = #tpu.core_type<tc>, window_params = [{pipeline_mode = #tpu.pipeline_mode<synchronous>, transform_indices = @transform_0, window_bounds = array<i64: 32, 16>}, {transform_indices = @transform_1, window_bounds = array<i64: 16, 128>}, {transform_indices = @transform_2, window_bounds = array<i64: 16, 128>}, {transform_indices = @transform_3, window_bounds = array<i64: 1, 128>}]} {
    %c0_i32 = arith.constant 0 : i32
    %0 = arith.cmpi eq, %arg1, %c0_i32 : i32
    %1 = arith.extui %0 : i1 to i32
    %c0_i32_0 = arith.constant 0 : i32
    %2 = arith.cmpi ne, %1, %c0_i32_0 : i32
    scf.if %2 {
      %cst_12 = arith.constant 0.000000e+00 : f32
      %20 = vector.broadcast %cst_12 : f32 to vector<16x128xf32>
      %c0_13 = arith.constant 0 : index
      %c0_14 = arith.constant 0 : index
      %21 = vector.load %arg6[%c0_13, %c0_14] : memref<16x128xf32, #tpu.memory_space<vmem>>, vector<16x128xf32>
      tpu.vector_store %arg6[%c0_13, %c0_14], %20 {strides = array<i32>} : memref<16x128xf32, #tpu.memory_space<vmem>>, vector<16x128xf32>,
    } else {
    }
    %c0 = arith.constant 0 : index
    %c0_1 = arith.constant 0 : index
    %3 = vector.load %arg2[%c0, %c0_1] : memref<32x16xf32, #tpu.memory_space<vmem>>, vector<32x16xf32>
    %c0_2 = arith.constant 0 : index
    %c0_3 = arith.constant 0 : index
    %4 = vector.load %arg3[%c0_2, %c0_3] : memref<16x128xf32, #tpu.memory_space<vmem>>, vector<16x128xf32>
    %c0_4 = arith.constant 0 : index
    %c0_5 = arith.constant 0 : index
    %5 = vector.load %arg4[%c0_4, %c0_5] : memref<16x128xf32, #tpu.memory_space<vmem>>, vector<16x128xf32>
    %6 = arith.subf %4, %5 : vector<16x128xf32>
    %cst = arith.constant dense<0.000000e+00> : vector<32x128xf32>
    %7 = tpu.matmul %3, %6, %cst {dimension_numbers = #tpu.dot_dimension_numbers<[1], [0], [0], [1], [0, 0, 1, 1], [], []>} : vector<32x16xf32>, vector<16x128xf32>, vector<32x128xf32> -> vector<32x128xf32>
    %8 = vector.extract_strided_slice %7 {offsets = [0, 0], sizes = [16, 128], strides = [1, 1]} : vector<32x128xf32> to vector<16x128xf32>
    %9 = vector.extract_strided_slice %7 {offsets = [16, 0], sizes = [16, 128], strides = [1, 1]} : vector<32x128xf32> to vector<16x128xf32>
    %10 = arith.mulf %8, %8 : vector<16x128xf32>
    %11 = arith.mulf %9, %9 : vector<16x128xf32>
    %12 = arith.addf %10, %11 : vector<16x128xf32>
    %13 = math.sqrt %12 : vector<16x128xf32>
    %c0_6 = arith.constant 0 : index
    %c0_7 = arith.constant 0 : index
    %14 = vector.load %arg6[%c0_6, %c0_7] : memref<16x128xf32, #tpu.memory_space<vmem>>, vector<16x128xf32>
    %15 = arith.addf %14, %13 : vector<16x128xf32>
    %c0_8 = arith.constant 0 : index
    %c0_9 = arith.constant 0 : index
    %16 = vector.load %arg6[%c0_8, %c0_9] : memref<16x128xf32, #tpu.memory_space<vmem>>, vector<16x128xf32>
    tpu.vector_store %arg6[%c0_8, %c0_9], %15 {strides = array<i32>} : memref<16x128xf32, #tpu.memory_space<vmem>>, vector<16x128xf32>,
    %c0_i32_10 = arith.constant 0 : i32
    %17 = arith.cmpi eq, %arg1, %c0_i32_10 : i32
    %18 = arith.extui %17 : i1 to i32
    %c0_i32_11 = arith.constant 0 : i32
    %19 = arith.cmpi ne, %18, %c0_i32_11 : i32
    scf.if %19 {
      %c0_12 = arith.constant 0 : index
      %c0_13 = arith.constant 0 : index
      %20 = vector.load %arg6[%c0_12, %c0_13] : memref<16x128xf32, #tpu.memory_space<vmem>>, vector<16x128xf32>
      %21 = vector.shape_cast %20 : vector<16x128xf32> to vector<1x16x128xf32>
      %cst_14 = arith.constant dense<0.000000e+00> : vector<1xf32>
      %22 = vector.multi_reduction <add>, %21, %cst_14 [1, 2] : vector<1x16x128xf32> to vector<1xf32>
      %23 = vector.shape_cast %22 : vector<1xf32> to vector<1x1x1xf32>
      %24 = vector.extract %23[0, 0, 0] : f32 from vector<1x1x1xf32>
      %25 = tpu.iota {dimensions = array<i32: 1>} : vector<1x128xi32>
      %c0_i32_15 = arith.constant 0 : i32
      %26 = vector.broadcast %c0_i32_15 : i32 to vector<1x128xi32>
      %27 = arith.cmpi eq, %25, %26 : vector<1x128xi32>
      %cst_16 = arith.constant 0.000000e+00 : f32
      %28 = vector.broadcast %24 : f32 to vector<1x128xf32>
      %29 = vector.broadcast %cst_16 : f32 to vector<1x128xf32>
      %30 = arith.select %27, %28, %29 : vector<1x128xi1>, vector<1x128xf32>
      %c0_17 = arith.constant 0 : index
      %c0_18 = arith.constant 0 : index
      %31 = vector.load %arg5[%c0_17, %c0_18] : memref<1x128xf32, #tpu.memory_space<vmem>>, vector<1x128xf32>
      tpu.vector_store %arg5[%c0_17, %c0_18], %30 {strides = array<i32>} : memref<1x128xf32, #tpu.memory_space<vmem>>, vector<1x128xf32>,
    } else {
    }
    return
  }
  func.func @transform_0(%arg0: i32, %arg1: i32) -> (i32, i32) {
    %c0_i32 = arith.constant 0 : i32
    %c0_i32_0 = arith.constant 0 : i32
    %c0_i32_1 = arith.constant 0 : i32
    return %c0_i32, %c0_i32_0 : i32, i32
  }
  func.func @transform_1(%arg0: i32, %arg1: i32) -> (i32, i32) {
    %c1_i32 = arith.constant 1 : i32
    %0 = arith.muli %arg0, %c1_i32 : i32
    %1 = arith.addi %0, %arg1 : i32
    %c0_i32 = arith.constant 0 : i32
    %c0_i32_0 = arith.constant 0 : i32
    return %c0_i32, %1 : i32, i32
  }
  func.func @transform_2(%arg0: i32, %arg1: i32) -> (i32, i32) {
    %c1_i32 = arith.constant 1 : i32
    %0 = arith.muli %arg0, %c1_i32 : i32
    %1 = arith.addi %0, %arg1 : i32
    %c0_i32 = arith.constant 0 : i32
    %c0_i32_0 = arith.constant 0 : i32
    return %c0_i32, %1 : i32, i32
  }
  func.func @transform_3(%arg0: i32, %arg1: i32) -> (i32, i32) {
    %c0_i32 = arith.constant 0 : i32
    %c0_i32_0 = arith.constant 0 : i32
    return %c0_i32, %arg0 : i32, i32
  }
}

</mosaic_0001>

<llo_original>
// kernel: tpu_custom_call.1
$region0: #{tpu_custom_call.1}
  #allocation0 [shape = 'u32[]', space=smem, size = 0x4, offset = 0x4, fixed_abs, tag = 'smem constant byte address 0x4 - core index']
  #allocation1 [shape = 'u32[144,128]{1,0:T(1,128)}', space=vmem, size = 0x12000, scoped, tag = 'internal scratch']
  #allocation2 [shape = 'f32[16,128]{1,0:T(8,128)}', space=vmem, size = 0x2000, scoped, tag = 'scratch operand']
  %s0 = inlined_call_operand.vmem [shape: f32[32,16], index: 0, kind: input, shape index: {}]
  %s1 = inlined_call_operand.vmem [shape: f32[16,256], index: 1, kind: input, shape index: {}]
  %s2 = inlined_call_operand.hbm [shape: f32[16,256], index: 2, kind: input, shape index: {}]
  %s3 = inlined_call_operand.hbm [shape: f32[1,256], index: 3, kind: output, shape index: {}]
  %s4 = sld [smem:[#allocation0]]
  $region95: #{tpu_custom_call.1} parent=0
    _
  %s6 = ssub.s32 1, %s4
  %s7 = scalar_select 0, %s6, %s4
  $region1: #{tpu_custom_call.1} parent=0
    #allocation3 [shape = 'u8[16384]{0}', space=vmem, size = 0x4000, scoped, tag = 'input window, operand 1']
    #allocation4 [shape = 'u8[16384]{0}', space=vmem, size = 0x4000, scoped, tag = 'input window, operand 2']
    #allocation5 [shape = 's32[2]{0}', space=sflag, size = 0x8, scoped, tag = 'scoped memory for tpu_custom_call.1']
    #allocation6 [shape = 's32[2]{0}', space=sflag, size = 0x8, scoped, tag = 'scoped memory for tpu_custom_call.1']
    #allocation7 [shape = 'u8[1024]{0}', space=vmem, size = 0x400, scoped, tag = 'output window, operand 0']
    %8 = vsyncpa [#allocation5], 0
    %s9 = scalar_lea.sflag [#allocation5], 1
    %10 = vsyncpa %s9, 0
    %11 = vsyncpa [#allocation6], 0
    %s12 = scalar_lea.sflag [#allocation6], 1
    %13 = vsyncpa %s12, 0
    loop: start=0, step=1, limit=4
    $region2: #{tpu_custom_call.1} parent=1 // loop_pre_header
      _
    $region3: #{tpu_custom_call.1} parent=1 // loop_header
      %s15 = sphi 0, %s19
      %p16 = scmp.ge.s32.totalorder %s15, 4
      %s22 = sphi 0, %s34
      %s23 = sphi 0, %s30
      %s24 = sphi 0, %s22
      %s25 = sphi 0, %s23
      %s26 = sphi 0, %s24
      %s27 = sphi 0, %s25
      %s35 = sphi 0, %s35
      %s37 = sphi 0, %s35
      %s38 = sphi 0, %s37
      %s52 = sphi 0, %s38
      %s60 = sphi 0, %s62
      %s63 = sphi 0, %s60
      %s64 = sphi 0, %s63
      %s80 = sphi 0, %s64
      %s88 = sphi 0, %s90
      %s91 = sphi 0, %s88
      %s92 = sphi 0, %s91
      %s108 = sphi 0, %s92
      %s114 = sphi 0, %s116
      %s117 = sphi 0, %s114
      %s118 = sphi 0, %s117
      %s134 = sphi 0, %s118
    $region4: #{tpu_custom_call.1} parent=1 // loop_header_branch
      %18 = sbr.rel (%p16) target = $region8
    $region5: #{tpu_custom_call.1} parent=1 // loop_body
      %s20 = ssub.s32 %s15, 1
      %s21 = ssub.s32 %s15, 2
      %s28 = sadd.s32 1, %s23
      %p29 = scmp.ge.s32.totalorder %s28, 1
      %s30 = scalar_select %p29, 0, %s28
      %s31 = sadd.s32 1, %s22
      %s32 = scalar_select %p29, %s31, %s22
      %p33 = scmp.ge.s32.totalorder %s32, 2
      %s34 = scalar_select %p33, 0, %s32
      %s36 = sadd.s32 %s35, 1
      %p39 = scmp.eq.s32.totalorder %s15, 1
      %p40 = scmp.ne.s32.totalorder %s35, %s37
      %p41 = scmp.eq.s32.totalorder %s15, 0
      %p42 = por %p40, %p41
      %p43 = scmp.ne.s32.totalorder %s35, %s37
      %p44 = scmp.eq.s32.totalorder %s20, 1
      %p45 = por %p43, %p44
      %p46 = scmp.ne.s32.totalorder %s37, %s38
      %p47 = scmp.eq.s32.totalorder %s20, 0
      %p48 = por %p46, %p47
      %p49 = scmp.ne.s32.totalorder %s37, %s38
      %p50 = scmp.eq.s32.totalorder %s21, 1
      %p51 = por %p49, %p50
      %p53 = scmp.ne.s32.totalorder %s38, %s52
      %p54 = scmp.eq.s32.totalorder %s21, 0
      %p55 = por %p53, %p54
      %s56 = sadd.s32 %s22, %s23
      %s57 = sadd.s32 %s34, %s30
      %s58 = ssub.s32 %s56, %s57
      %p59 = scmp.eq.s32.totalorder %s58, 0
      %s61 = sadd.s32 %s60, 1
      %s62 = scalar_select %p59, %s60, %s61
      %p65 = pneg %p59
      %p66 = scmp.eq.s32.totalorder %s15, 1
      %p67 = por %p65, %p66
      %p68 = scmp.ne.s32.totalorder %s60, %s63
      %p69 = scmp.eq.s32.totalorder %s15, 0
      %p70 = por %p68, %p69
      %p71 = scmp.ne.s32.totalorder %s60, %s63
      %p72 = scmp.eq.s32.totalorder %s20, 1
      %p73 = por %p71, %p72
      %p74 = scmp.ne.s32.totalorder %s63, %s64
      %p75 = scmp.eq.s32.totalorder %s20, 0
      %p76 = por %p74, %p75
      %p77 = scmp.ne.s32.totalorder %s63, %s64
      %p78 = scmp.eq.s32.totalorder %s21, 1
      %p79 = por %p77, %p78
      %p81 = scmp.ne.s32.totalorder %s64, %s80
      %p82 = scmp.eq.s32.totalorder %s21, 0
      %p83 = por %p81, %p82
      %s84 = sadd.s32 %s22, %s23
      %s85 = sadd.s32 %s34, %s30
      %s86 = ssub.s32 %s84, %s85
      %p87 = scmp.eq.s32.totalorder %s86, 0
      %s89 = sadd.s32 %s88, 1
      %s90 = scalar_select %p87, %s88, %s89
      %p93 = pneg %p87
      %p94 = scmp.eq.s32.totalorder %s15, 1
      %p95 = por %p93, %p94
      %p96 = scmp.ne.s32.totalorder %s88, %s91
      %p97 = scmp.eq.s32.totalorder %s15, 0
      %p98 = por %p96, %p97
      %p99 = scmp.ne.s32.totalorder %s88, %s91
      %p100 = scmp.eq.s32.totalorder %s20, 1
      %p101 = por %p99, %p100
      %p102 = scmp.ne.s32.totalorder %s91, %s92
      %p103 = scmp.eq.s32.totalorder %s20, 0
      %p104 = por %p102, %p103
      %p105 = scmp.ne.s32.totalorder %s91, %s92
      %p106 = scmp.eq.s32.totalorder %s21, 1
      %p107 = por %p105, %p106
      %p109 = scmp.ne.s32.totalorder %s92, %s108
      %p110 = scmp.eq.s32.totalorder %s21, 0
      %p111 = por %p109, %p110
      %s112 = ssub.s32 %s22, %s34
      %p113 = scmp.eq.s32.totalorder %s112, 0
      %s115 = sadd.s32 %s114, 1
      %s116 = scalar_select %p113, %s114, %s115
      %p119 = pneg %p113
      %p120 = scmp.eq.s32.totalorder %s15, 1
      %p121 = por %p119, %p120
      %p122 = scmp.ne.s32.totalorder %s114, %s117
      %p123 = scmp.eq.s32.totalorder %s15, 0
      %p124 = por %p122, %p123
      %p125 = scmp.ne.s32.totalorder %s114, %s117
      %p126 = scmp.eq.s32.totalorder %s20, 1
      %p127 = por %p125, %p126
      %p128 = scmp.ne.s32.totalorder %s117, %s118
      %p129 = scmp.eq.s32.totalorder %s20, 0
      %p130 = por %p128, %p129
      %p131 = scmp.ne.s32.totalorder %s117, %s118
      %p132 = scmp.eq.s32.totalorder %s21, 1
      %p133 = por %p131, %p132
      %p135 = scmp.ne.s32.totalorder %s118, %s134
      %p136 = scmp.eq.s32.totalorder %s21, 0
      %p137 = por %p135, %p136
      %p138 = scmp.le.s32.totalorder 1, %s15
      %p139 = scmp.lt.s32.totalorder %s15, 3
      %p140 = pnand %p138, %p139
      %p141 = pneg %p140
      // Predicated region
      $region9: #{tpu_custom_call.1} parent=5 // pred_check
        _
      $region10: #{tpu_custom_call.1} parent=5 // pred_check_branch
        %143 = sbr.rel (%p140) target = $region12
      $region11: #{tpu_custom_call.1} parent=5 // pred_region
        %s144 = ssub.s32 %s15, 1
        // Predicated region
        $region13: #{tpu_custom_call.1} parent=11 // pred_check
          %p145 = pneg %p48
        $region14: #{tpu_custom_call.1} parent=11 // pred_check_branch
          %147 = sbr.rel (%p145) target = $region16
        $region15: #{tpu_custom_call.1} parent=11 // pred_region
          _
        $region16: #{tpu_custom_call.1} parent=11 // pred_fallthru
          _
      $region12: #{tpu_custom_call.1} parent=5 // pred_fallthru
        _
      %p148 = scmp.lt.s32.totalorder %s15, 2
      // Predicated region
      $region17: #{tpu_custom_call.1} parent=5 // pred_check
        %p149 = pneg %p148
      $region18: #{tpu_custom_call.1} parent=5 // pred_check_branch
        %151 = sbr.rel (%p149) target = $region20
      $region19: #{tpu_custom_call.1} parent=5 // pred_region
        // Predicated region
        $region21: #{tpu_custom_call.1} parent=19 // pred_check
          %p152 = pneg %p70
        $region22: #{tpu_custom_call.1} parent=19 // pred_check_branch
          %154 = sbr.rel (%p152) target = $region24
        $region23: #{tpu_custom_call.1} parent=19 // pred_region
          %s155 = sand.u32 %s60, 1
          %s156 = sand.u32 %s60, 1
          %s157 = smul.addr %s156, 16
          %s158 = scalar_lea.vmem [#allocation3], %s157
          %s159 = sadd.s32 %s22, %s23
          %s160 = smul.addr %s159, 8
          %s161 = scalar_lea.vmem %s1, %s160
          // Predicated region
          $region25: #{tpu_custom_call.1} parent=23 // pred_check
            _
          $region26: #{tpu_custom_call.1} parent=23 // pred_check_branch
            %163 = sbr.rel (0) target = $region28
          $region27: #{tpu_custom_call.1} parent=23 // pred_region
            // Predicated region
            $region29: #{tpu_custom_call.1} parent=27 // pred_check
              _
            $region30: #{tpu_custom_call.1} parent=27 // pred_check_branch
              %165 = sbr.rel (0) target = $region32
            $region31: #{tpu_custom_call.1} parent=27 // pred_region
              // Predicated region
              $region44: #{tpu_custom_call.1} parent=31 // pred_check
                _
              $region45: #{tpu_custom_call.1} parent=31 // pred_check_branch
                %182 = sbr.rel (0) target = $region47
              $region46: #{tpu_custom_call.1} parent=31 // pred_region
                loop: start=0, step=1, limit=1
                $region48: #{tpu_custom_call.1} parent=46 // loop_pre_header
                  _
                $region49: #{tpu_custom_call.1} parent=46 // loop_header
                  %s184 = sphi 0, %s188
                  %p185 = scmp.ge.s32.totalorder %s184, 1
                  %s189 = sphi %s161, %s161
                  %s190 = sphi %s158, %s158
                $region50: #{tpu_custom_call.1} parent=46 // loop_header_branch
                  %187 = sbr.rel (%p185) target = $region54
                $region51: #{tpu_custom_call.1} parent=46 // loop_body
                  %v191 = vld [vmem:[%s189] sm:$0xff]
                  %192 = vst [vmem:[%s190] sm:$0xff] %v191
                  %v193 = vld [vmem:[%s189 + $0x10] sm:$0xff]
                  %194 = vst [vmem:[%s190 + $0x8] sm:$0xff] %v193
                $region52: #{tpu_custom_call.1} parent=46 // loop_footer
                  %s188 = sadd.s32 1, %s184
                $region53: #{tpu_custom_call.1} parent=46 // loop_footer_branch
                  %183 = sbr.rel target = $region49
                $region54: #{tpu_custom_call.1} parent=46 // loop_exit
                  _
              $region47: #{tpu_custom_call.1} parent=31 // pred_fallthru
                _
              // Predicated region
              $region55: #{tpu_custom_call.1} parent=31 // pred_check
                _
              $region56: #{tpu_custom_call.1} parent=31 // pred_check_branch
                %196 = sbr.rel target = $region58
              $region57: #{tpu_custom_call.1} parent=31 // pred_region
                _
              $region58: #{tpu_custom_call.1} parent=31 // pred_fallthru
                _
            $region32: #{tpu_custom_call.1} parent=27 // pred_fallthru
              _
            // Predicated region
            $region33: #{tpu_custom_call.1} parent=27 // pred_check
              _
            $region34: #{tpu_custom_call.1} parent=27 // pred_check_branch
              %167 = sbr.rel target = $region36
            $region35: #{tpu_custom_call.1} parent=27 // pred_region
              loop: start=0, step=1, limit=1
              $region37: #{tpu_custom_call.1} parent=35 // loop_pre_header
                _
              $region38: #{tpu_custom_call.1} parent=35 // loop_header
                %s170 = sphi 0, %s174
                %p171 = scmp.ge.s32.totalorder %s170, 1
                %s175 = sphi %s161, %s161
                %s176 = sphi %s158, %s158
              $region39: #{tpu_custom_call.1} parent=35 // loop_header_branch
                %173 = sbr.rel (%p171) target = $region43
              $region40: #{tpu_custom_call.1} parent=35 // loop_body
                %v177 = vld [vmem:[%s175] sm:$0xff]
                %178 = vst [vmem:[%s176] sm:$0xff] %v177
                %v179 = vld [vmem:[%s175 + $0x10] sm:$0xff]
                %180 = vst [vmem:[%s176 + $0x8] sm:$0xff] %v179
              $region41: #{tpu_custom_call.1} parent=35 // loop_footer
                %s174 = sadd.s32 1, %s170
              $region42: #{tpu_custom_call.1} parent=35 // loop_footer_branch
                %169 = sbr.rel target = $region38
              $region43: #{tpu_custom_call.1} parent=35 // loop_exit
                _
            $region36: #{tpu_custom_call.1} parent=27 // pred_fallthru
              _
          $region28: #{tpu_custom_call.1} parent=23 // pred_fallthru
            _
          %197 = vnop
        $region24: #{tpu_custom_call.1} parent=19 // pred_fallthru
          _
        // Predicated region
        $region59: #{tpu_custom_call.1} parent=19 // pred_check
          %p198 = pneg %p98
        $region60: #{tpu_custom_call.1} parent=19 // pred_check_branch
          %200 = sbr.rel (%p198) target = $region62
        $region61: #{tpu_custom_call.1} parent=19 // pred_region
          %s201 = sand.u32 %s88, 1
          %s202 = scalar_lea.sflag [#allocation5], %s201
          %s203 = sand.u32 %s88, 1
          %s204 = smul.addr %s203, 16
          %s205 = scalar_lea.vmem [#allocation4], %s204
          %s206 = sadd.s32 %s22, %s23
          %s208 = ssub.s32 256, 256
          %209 = vsyncadd %s202, %s208
          %s210 = smul.addr %s206, 128
          %s211 = scalar_lea.hbm %s2, %s210
          %s212 = sshll.u32 %s205, 4
          %s213 = int_to_ptr.vmem [resolvable:$true] %s212
          %218 = dma.hbm_to_vmem [thread:$0]  %s211, 256, %s213, %s202, 256, 128, 8
        $region62: #{tpu_custom_call.1} parent=19 // pred_fallthru
          _
      $region20: #{tpu_custom_call.1} parent=5 // pred_fallthru
        _
      %p219 = scmp.le.s32.totalorder 1, %s15
      %p220 = scmp.lt.s32.totalorder %s15, 3
      %p221 = pnand %p219, %p220
      %p222 = pneg %p221
      // Predicated region
      $region63: #{tpu_custom_call.1} parent=5 // pred_check
        _
      $region64: #{tpu_custom_call.1} parent=5 // pred_check_branch
        %224 = sbr.rel (%p221) target = $region66
      $region65: #{tpu_custom_call.1} parent=5 // pred_region
        %s225 = ssub.s32 %s15, 1
        %s226 = sand.u32 %s63, 1
        %s227 = sand.u32 %s63, 1
        %s228 = smul.addr %s227, 16
        %s229 = scalar_lea.vmem [#allocation3], %s228
        // Predicated region
        $region67: #{tpu_custom_call.1} parent=65 // pred_check
          %p230 = pneg %p76
        $region68: #{tpu_custom_call.1} parent=65 // pred_check_branch
          %232 = sbr.rel (%p230) target = $region70
        $region69: #{tpu_custom_call.1} parent=65 // pred_region
          _
        $region70: #{tpu_custom_call.1} parent=65 // pred_fallthru
          _
        %s233 = sand.u32 %s91, 1
        %s234 = scalar_lea.sflag [#allocation5], %s233
        %s235 = sand.u32 %s91, 1
        %s236 = smul.addr %s235, 16
        %s237 = scalar_lea.vmem [#allocation4], %s236
        // Predicated region
        $region71: #{tpu_custom_call.1} parent=65 // pred_check
          %p238 = pneg %p104
        $region72: #{tpu_custom_call.1} parent=65 // pred_check_branch
          %240 = sbr.rel (%p238) target = $region74
        $region73: #{tpu_custom_call.1} parent=65 // pred_region
          %241 = dma.done %s234, 256
        $region74: #{tpu_custom_call.1} parent=65 // pred_fallthru
          _
        %p242 = pneg %p48
        %p243 = pneg %p45
        %s244 = sand.u32 %s63, 1
        %s245 = sand.u32 %s63, 1
        %s246 = smul.addr %s245, 16
        %s247 = scalar_lea.vmem [#allocation3], %s246
        %p248 = pneg %p76
        %p249 = pneg %p73
        %s250 = sand.u32 %s91, 1
        %s251 = scalar_lea.sflag [#allocation5], %s250
        %s252 = sand.u32 %s91, 1
        %s253 = smul.addr %s252, 16
        %s254 = scalar_lea.vmem [#allocation4], %s253
        %p255 = pneg %p104
        %p256 = pneg %p101
        %p257 = pneg %p130
        %p258 = pneg %p127
        %s259 = sand.u32 %s117, 1
        %s260 = scalar_lea.sflag [#allocation6], %s259
        %s261 = sand.u32 %s117, 1
        %s262 = scalar_lea.vmem [#allocation7], %s261
        %s263 = sadd.s32 %s24, %s25
        %s264 = sadd.s32 %s24, %s25
        %p265 = scmp.eq.s32.totalorder %s25, 0
        // Predicated region
        $region75: #{tpu_custom_call.1} parent=65 // pred_check
          %p266 = pneg %p265
        $region76: #{tpu_custom_call.1} parent=65 // pred_check_branch
          %268 = sbr.rel (%p266) target = $region78
        $region77: #{tpu_custom_call.1} parent=65 // pred_region
          %269 = vst [vmem:[#allocation2] sm:$0xff] 0.0
          %270 = vst [vmem:[#allocation2 + $0x8] sm:$0xff] 0.0
        $region78: #{tpu_custom_call.1} parent=65 // pred_fallthru
          _
        %v271 = vld [vmem:[%s0] sm:$0xff]
        %v272 = vld [vmem:[%s0 + $0x8] sm:$0xff]
        %v273 = vld [vmem:[%s0 + $0x10] sm:$0xff]
        %v274 = vld [vmem:[%s0 + $0x18] sm:$0xff]
        %v275 = vld [vmem:[%s229] sm:$0xff]
        %v276 = vld [vmem:[%s229 + $0x8] sm:$0xff]
        %v277 = vld [vmem:[%s237] sm:$0xff]
        %v278 = vld [vmem:[%s237 + $0x8] sm:$0xff]
        %v279 = vsub.f32 %v275, %v277
        %v280 = vsub.f32 %v276, %v278
        %vm281 = vcmask 130048
        %v283 = vsel %vm281, %v271, 0
        %v286 = vsel %vm281, %v272, 0
        %v289 = vsel %vm281, %v273, 0
        %v292 = vsel %vm281, %v274, 0
        %294 = vmatprep.subr.mxu0 0.0
        %295 = vmatpush1.msra.mxu0 %v279
        %296 = vmatprep.subr.mxu0 0.0
        %297 = vmatpush1.msra.mxu0 %v280
        %298 = vmatprep.subr.mxu0 0.0
        %299 = vmatpush1.msra.mxu0 0.0
        %300 = vmatprep.subr.mxu0 0.0
        %301 = vmatpush1.msra.mxu0 0.0
        %302 = vmatprep.subr.mxu0 0.0
        %303 = vmatpush1.msra.mxu0 0.0
        %304 = vmatprep.subr.mxu0 0.0
        %305 = vmatpush1.msra.mxu0 0.0
        %306 = vmatprep.subr.mxu0 0.0
        %307 = vmatpush1.msra.mxu0 0.0
        %308 = vmatprep.subr.mxu0 0.0
        %309 = vmatpush1.msra.mxu0 0.0
        %310 = vmatprep.subr.mxu0 0.0
        %311 = vmatpush1.msra.mxu0 0.0
        %312 = vmatprep.subr.mxu0 0.0
        %313 = vmatpush1.msra.mxu0 0.0
        %314 = vmatprep.subr.mxu0 0.0
        %315 = vmatpush1.msra.mxu0 0.0
        %316 = vmatprep.subr.mxu0 0.0
        %317 = vmatpush1.msra.mxu0 0.0
        %318 = vmatprep.subr.mxu0 0.0
        %319 = vmatpush1.msra.mxu0 0.0
        %320 = vmatprep.subr.mxu0 0.0
        %321 = vmatpush1.msra.mxu0 0.0
        %322 = vmatprep.subr.mxu0 0.0
        %323 = vmatpush1.msra.mxu0 0.0
        %324 = vmatprep.subr.mxu0 0.0
        %325 = vmatpush1.msra.mxu0 0.0
        %326 = vmatprep.subr.mxu0 0.0
        %327 = vmatpush1.msra.mxu0 0.0
        %328 = vmatprep.subr.mxu0 0.0
        %329 = vmatpush1.msra.mxu0 0.0
        %330 = vmatprep.subr.mxu0 0.0
        %331 = vmatpush1.msra.mxu0 0.0
        %332 = vmatprep.subr.mxu0 0.0
        %333 = vmatpush1.msra.mxu0 0.0
        %334 = vmatprep.subr.mxu0 0.0
        %335 = vmatpush1.msra.mxu0 0.0
        %336 = vmatprep.subr.mxu0 0.0
        %337 = vmatpush1.msra.mxu0 0.0
        %338 = vmatprep.subr.mxu0 0.0
        %339 = vmatpush1.msra.mxu0 0.0
        %340 = vmatprep.subr.mxu0 0.0
        %341 = vmatpush1.msra.mxu0 0.0
        %342 = vmatprep.subr.mxu0 0.0
        %343 = vmatpush1.msra.mxu0 0.0
        %344 = vmatprep.subr.mxu0 0.0
        %345 = vmatpush1.msra.mxu0 0.0
        %346 = vmatprep.subr.mxu0 0.0
        %347 = vmatpush1.msra.mxu0 0.0
        %348 = vmatprep.subr.mxu0 0.0
        %349 = vmatpush1.msra.mxu0 0.0
        %350 = vmatprep.subr.mxu0 0.0
        %351 = vmatpush1.msra.mxu0 0.0
        %352 = vmatprep.subr.mxu0 0.0
        %353 = vmatpush1.msra.mxu0 0.0
        %354 = vmatprep.subr.mxu0 0.0
        %355 = vmatpush1.msra.mxu0 0.0
        %356 = vmatprep.subr.mxu0 0.0
        %357 = vmatpush1.msra.mxu0 0.0
        %358 = vmatprep.mubr.f32.mxu0 0.0
        %359 = vmatmul.mubr.f32.gmra.mrb[0].mxu0 %v283
        %v360 = vpop.f32.mrb[0].mxu0
        %v361 = vadd.f32 0.0, %v360
        %v362 = vpop.f32.mrb[0].mxu0
        %363 = vmatprep.mubr.f32.mxu0 0.0
        %364 = vmatmul.mubr.f32.gmra.mrb[0].mxu0 %v286
        %v365 = vpop.f32.mrb[0].mxu0
        %v366 = vadd.f32 0.0, %v365
        %v367 = vpop.f32.mrb[0].mxu0
        %368 = vmatprep.mubr.f32.mxu0 0.0
        %369 = vmatmul.mubr.f32.gmra.mrb[0].mxu0 %v289
        %v370 = vpop.f32.mrb[0].mxu0
        %v371 = vadd.f32 0.0, %v370
        %v372 = vpop.f32.mrb[0].mxu0
        %373 = vmatprep.mubr.f32.mxu0 0.0
        %374 = vmatmul.mubr.f32.gmra.mrb[0].mxu0 %v292
        %v375 = vpop.f32.mrb[0].mxu0
        %v376 = vadd.f32 0.0, %v375
        %v377 = vpop.f32.mrb[0].mxu0
        %378 = vdwg.mxu0
        %v379 = vmul.f32 %v361, %v361
        %v380 = vmul.f32 %v366, %v366
        %v381 = vmul.f32 %v371, %v371
        %v382 = vmul.f32 %v376, %v376
        %v383 = vadd.f32 %v379, %v381
        %v384 = vadd.f32 %v380, %v382
        %v385 = vrsqrt.pop %v383
        %v386 = vmul.f32 %v383, %v385
        %vm387 = vcmp.eq.f32.partialorder %v383, inf
        %v388 = vsel %vm387, %v383, %v386
        %vm389 = vcmp.eq.f32.partialorder %v383, 0.0
        %v390 = vand.u32 %v383, 2147483648
        %v391 = vsel %vm389, %v390, %v388
        %v392 = vrsqrt.pop %v384
        %v393 = vmul.f32 %v384, %v392
        %vm394 = vcmp.eq.f32.partialorder %v384, inf
        %v395 = vsel %vm394, %v384, %v393
        %vm396 = vcmp.eq.f32.partialorder %v384, 0.0
        %v397 = vand.u32 %v384, 2147483648
        %v398 = vsel %vm396, %v397, %v395
        %v399 = vld [vmem:[#allocation2] sm:$0xff]
        %v400 = vld [vmem:[#allocation2 + $0x8] sm:$0xff]
        %v401 = vadd.f32 %v399, %v391
        %v402 = vadd.f32 %v400, %v398
        %403 = vst [vmem:[#allocation2] sm:$0xff] %v401
        %404 = vst [vmem:[#allocation2 + $0x8] sm:$0xff] %v402
        // Predicated region
        $region79: #{tpu_custom_call.1} parent=65 // pred_check
          %p405 = pneg %p265
        $region80: #{tpu_custom_call.1} parent=65 // pred_check_branch
          %407 = sbr.rel (%p405) target = $region82
        $region81: #{tpu_custom_call.1} parent=65 // pred_region
          %v408 = vld [vmem:[#allocation2] sm:$0xff]
          %v409 = vld [vmem:[#allocation2 + $0x8] sm:$0xff]
          %v410 = vadd.f32 %v408, %v409
          %411 = vadd.xlane.f32.xlu0 %v410
          %v412 = vpop.xlane.xlu0 %411
          %v413 = vrot.slane %v412, 4
          %v414 = vadd.f32 %v412, %v413
          %v415 = vrot.slane %v414, 2
          %v416 = vadd.f32 %v414, %v415
          %v417 = vrot.slane %v416, 1
          %v418 = vadd.f32 %v416, %v417
          %s419 = vtos %v418
          %v420 = vlaneseq
          %v421 = vand.u32 %v420, 127
          %vm422 = vcmp.eq.s32.totalorder %v421, 0
          %v423 = vstv %s419
          %v424 = vsel %vm422, %v423, 0.0
          %425 = vst [vmem:[%s262] sm:$0x1] %v424
        $region82: #{tpu_custom_call.1} parent=65 // pred_fallthru
          _
        %s426 = sand.u32 %s117, 1
        %s427 = scalar_lea.sflag [#allocation6], %s426
        %s428 = sand.u32 %s117, 1
        %s429 = scalar_lea.vmem [#allocation7], %s428
        // Predicated region
        $region83: #{tpu_custom_call.1} parent=65 // pred_check
          %p430 = pneg %p127
        $region84: #{tpu_custom_call.1} parent=65 // pred_check_branch
          %432 = sbr.rel (%p430) target = $region86
        $region85: #{tpu_custom_call.1} parent=65 // pred_region
          %s434 = ssub.s32 16, 16
          %435 = vsyncadd %s427, %s434
          %s436 = smul.addr %s24, 16
          %s437 = scalar_lea.hbm %s3, %s436
          %s439 = sshll.u32 %s429, 4
          %s440 = int_to_ptr.vmem [resolvable:$true] %s439
          %442 = dma.vmem_to_hbm [thread:$0]  %s440, 16, %s437, %s427
        $region86: #{tpu_custom_call.1} parent=65 // pred_fallthru
          _
      $region66: #{tpu_custom_call.1} parent=5 // pred_fallthru
        _
      %p443 = scmp.le.s32.totalorder 2, %s15
      // Predicated region
      $region87: #{tpu_custom_call.1} parent=5 // pred_check
        %p444 = pneg %p443
      $region88: #{tpu_custom_call.1} parent=5 // pred_check_branch
        %446 = sbr.rel (%p444) target = $region90
      $region89: #{tpu_custom_call.1} parent=5 // pred_region
        %s447 = ssub.s32 %s15, 2
        // Predicated region
        $region91: #{tpu_custom_call.1} parent=89 // pred_check
          %p448 = pneg %p133
        $region92: #{tpu_custom_call.1} parent=89 // pred_check_branch
          %450 = sbr.rel (%p448) target = $region94
        $region93: #{tpu_custom_call.1} parent=89 // pred_region
          %s451 = sand.u32 %s118, 1
          %s452 = scalar_lea.sflag [#allocation6], %s451
          %s453 = sand.u32 %s118, 1
          %s454 = scalar_lea.vmem [#allocation7], %s453
          %455 = dma.done %s452, 16
        $region94: #{tpu_custom_call.1} parent=89 // pred_fallthru
          _
      $region90: #{tpu_custom_call.1} parent=5 // pred_fallthru
        _
    $region6: #{tpu_custom_call.1} parent=1 // loop_footer
      %s19 = sadd.s32 1, %s15
    $region7: #{tpu_custom_call.1} parent=1 // loop_footer_branch
      %14 = sbr.rel target = $region3
    $region8: #{tpu_custom_call.1} parent=1 // loop_exit
      _
    %456 = vsyncpa [#allocation5], 1
    %s457 = scalar_lea.sflag [#allocation5], 1
    %458 = vsyncpa %s457, 1
    %459 = vsyncpa [#allocation6], 1
    %s460 = scalar_lea.sflag [#allocation6], 1
    %461 = vsyncpa %s460, 1

</llo_original>
